<compile_context>
chip_gen: v7x
topology: tpu7x:2x2x1
jax: 0.10.0
libtpu: 0.0.40
codegen_flags: <defaults>
</compile_context>

<pallas_src>
import functools

import jax
import jax.numpy as jnp
from jax.experimental import pallas as pl
from jax.experimental.pallas import tpu as pltpu


def _smoe_kernel(experts_ref, wg_ref, bg_ref, out_ref, *, num_experts, k):
    """One (batch, token-tile) step: gate matmul + softmax top-k routing.

    experts_ref: (E, TB)  expert values, experts on sublanes, tokens on lanes
    wg_ref:      (E, E)   1x1 gate conv weight (out_expert, in_expert)
    bg_ref:      (E, 1)   gate bias
    out_ref:     (k, TB)  selected (weighted) expert outputs, lane-dense
    """
    xe = experts_ref[...].astype(jnp.float32)        # (E, TB)
    w = wg_ref[...].astype(jnp.float32)              # (E, E)
    b = bg_ref[...].astype(jnp.float32)              # (E, 1)

    # --- gate: 1x1 conv over expert channels == (E,E)@(E,TB) matmul on the MXU ---
    logits = jnp.dot(w, xe, preferred_element_type=jnp.float32) + b   # (E, TB)

    # --- softmax over experts; normalization deferred to the selected rows ---
    m = jnp.max(logits, axis=0, keepdims=True)                        # (1, TB)
    e = jnp.exp(logits - m)                                           # (E, TB), unnormalized, >= 0
    inv_denom = pl.reciprocal(jnp.sum(e, axis=0, keepdims=True),
                              approx=False)                           # (1, TB)

    # --- iterative top-k (k small & static), descending, lowest-index tie break ---
    iota = jax.lax.broadcasted_iota(jnp.int32, e.shape, dimension=0)  # (E, TB)
    work = e
    rows = []
    for _ in range(k):
        best = jnp.max(work, axis=0, keepdims=True)                   # (1, TB) = j-th weight
        is_best = work == best
        idx = jnp.min(jnp.where(is_best, iota, num_experts), axis=0, keepdims=True)
        sel = iota == idx                                             # one-hot (E, TB)
        expert_val = jnp.sum(jnp.where(sel, xe, 0.0), axis=0, keepdims=True)  # (1, TB)
        rows.append(expert_val * best * inv_denom)                    # weight == best (monotone exp)
        work = jnp.where(sel, -1.0, work)                             # exclude; e >= 0 so -1 is safe

    # Single lane-dense store of all k rows.
    out_ref[...] = jnp.concatenate(rows, axis=0).astype(out_ref.dtype)
    # TODO(synk): routing_map / routing_indices are stored as module attributes
    # (side effects) in the PyTorch code; only `selected` is returned here.


def gated_spatial_moe2d_s(x, experts, gate_w, gate_b, *, out_planes, token_block=2048):
    """Forward pass. experts: (N, E, H, W) NCHW -> returns (N, out_planes, H, W)."""
    del x  # unused by the "_s" variant (gate consumes `experts`)
    N, E, H, W = experts.shape
    HW = H * W

    # Pick a lane-aligned token tile; zero-pad the token axis if needed.
    tb = min(token_block, HW)
    if tb < HW:
        tb = max((tb // 128) * 128, 128)
    HW_pad = pl.cdiv(HW, tb) * tb

    # Native layout: free reshape only, no transpose on the HBM side.
    experts_3d = experts.reshape(N, E, HW)                # (N, E, HW) contiguous
    if HW_pad != HW:
        experts_3d = jnp.pad(experts_3d, ((0, 0), (0, 0), (0, HW_pad - HW)))
    bg = gate_b.reshape(E, 1)

    kernel = functools.partial(_smoe_kernel, num_experts=E, k=out_planes)
    out = pl.pallas_call(
        kernel,
        out_shape=jax.ShapeDtypeStruct((N, out_planes, HW_pad), experts.dtype),
        grid=(N, HW_pad // tb),
        in_specs=[
            # experts tile: (E sublanes, tb lanes); batch dim squeezed out
            pl.BlockSpec((pl.Squeezed(), E, tb), lambda n, t: (n, 0, t)),
            pl.BlockSpec((E, E), lambda n, t: (0, 0)),    # gate weight (replicated)
            pl.BlockSpec((E, 1), lambda n, t: (0, 0)),    # gate bias   (replicated)
        ],
        out_specs=pl.BlockSpec((pl.Squeezed(), out_planes, tb), lambda n, t: (n, 0, t)),
        compiler_params=pltpu.CompilerParams(
            dimension_semantics=("parallel", "parallel")),
    )(experts_3d, gate_w, bg)

    if HW_pad != HW:
        out = out[:, :, :HW]
    # (N, k, HW) -> (N, k, H, W): free reshape, no transpose.
    return out.reshape(N, out_planes, H, W)


def _reference(x, experts, gate_w, gate_b, *, out_planes):
    """Pure-JAX reference of the same forward semantics."""
    del x
    xe = jnp.transpose(experts, (0, 2, 3, 1))                        # (N,H,W,E)
    logits = jnp.einsum("nhwe,oe->nhwo", xe, gate_w) + gate_b
    probs = jax.nn.softmax(logits, axis=-1)
    vals, idx = jax.lax.top_k(probs, out_planes)                     # descending
    sel_experts = jnp.take_along_axis(xe, idx, axis=-1)
    sel = sel_experts * vals
    return jnp.transpose(sel, (0, 3, 1, 2))                          # (N,k,H,W)


if __name__ == "__main__":
    key = jax.random.PRNGKey(0)
    k_x, k_e, k_w, k_b = jax.random.split(key, 4)

    # SpatialMoEConfig (synthetic): in_planes=4, num_experts=8, out_planes=2, 16x16 spatial
    N, C_in, H, W = 2, 4, 16, 16
    num_experts = 8
    out_planes = 2

    x = jax.random.normal(k_x, (N, C_in, H, W), dtype=jnp.float32)           # unused by fwd
    experts = jax.random.normal(k_e, (N, num_experts, H, W), dtype=jnp.float32)

    # Deterministic gate parameters: 1x1 Conv2d(num_experts -> num_experts)
    fan_in = float(num_experts)
    gate_w = jax.random.normal(k_w, (num_experts, num_experts), dtype=jnp.float32) / jnp.sqrt(fan_in)
    gate_b = jax.random.normal(k_b, (num_experts,), dtype=jnp.float32) * 0.01

    selected = gated_spatial_moe2d_s(x, experts, gate_w, gate_b, out_planes=out_planes)
    selected = jax.block_until_ready(selected)

    ref = _reference(x, experts, gate_w, gate_b, out_planes=out_planes)
    assert selected.shape == (N, out_planes, H, W), selected.shape
    assert jnp.allclose(selected, ref, atol=1e-5, rtol=1e-5), "mismatch vs reference"

    print("KERNEL_OK")
</pallas_src>

<mosaic_0001>
module attributes {stable_mosaic.version = 11 : i64} {
  func.func @_smoe_kernel(%arg0: i32, %arg1: i32, %arg2: memref<1x8x256xf32, #tpu.memory_space<vmem>>, %arg3: memref<8x8xf32, #tpu.memory_space<vmem>>, %arg4: memref<8x1xf32, #tpu.memory_space<vmem>>, %arg5: memref<1x2x256xf32, #tpu.memory_space<vmem>>) attributes {dimension_semantics = [#tpu.dimension_semantics<parallel>, #tpu.dimension_semantics<parallel>], iteration_bounds = array<i64: 2, 1>, scalar_prefetch = 0 : i64, scratch_operands = 0 : i64, tpu.core_type = #tpu.core_type<tc>, window_params = [{transform_indices = @transform_0, window_bounds = array<i64: 1, 8, 256>}, {pipeline_mode = #tpu.pipeline_mode<synchronous>, transform_indices = @transform_1, window_bounds = array<i64: 8, 8>}, {pipeline_mode = #tpu.pipeline_mode<synchronous>, transform_indices = @transform_2, window_bounds = array<i64: 8, 1>}, {transform_indices = @transform_3, window_bounds = array<i64: 1, 2, 256>}]} {
    %c0 = arith.constant 0 : index
    %c0_0 = arith.constant 0 : index
    %c0_1 = arith.constant 0 : index
    %0 = vector.load %arg2[%c0, %c0_0, %c0_1] : memref<1x8x256xf32, #tpu.memory_space<vmem>>, vector<1x8x256xf32>
    %1 = vector.shape_cast %0 : vector<1x8x256xf32> to vector<8x256xf32>
    %c0_2 = arith.constant 0 : index
    %c0_3 = arith.constant 0 : index
    %2 = vector.load %arg3[%c0_2, %c0_3] : memref<8x8xf32, #tpu.memory_space<vmem>>, vector<8x8xf32>
    %c0_4 = arith.constant 0 : index
    %c0_5 = arith.constant 0 : index
    %3 = vector.load %arg4[%c0_4, %c0_5] : memref<8x1xf32, #tpu.memory_space<vmem>>, vector<8x1xf32>
    %cst = arith.constant dense<0.000000e+00> : vector<8x256xf32>
    %4 = tpu.matmul %2, %1, %cst {dimension_numbers = #tpu.dot_dimension_numbers<[1], [0], [0], [1], [0, 0, 1, 1], [], []>} : vector<8x8xf32>, vector<8x256xf32>, vector<8x256xf32> -> vector<8x256xf32>
    %5 = vector.broadcast %3 : vector<8x1xf32> to vector<8x256xf32>
    %6 = arith.addf %4, %5 : vector<8x256xf32>
    %cst_6 = arith.constant dense<0xFF800000> : vector<256xf32>
    %7 = vector.multi_reduction <maximumf>, %6, %cst_6 [0] : vector<8x256xf32> to vector<256xf32>
    %8 = vector.shape_cast %7 : vector<256xf32> to vector<1x256xf32>
    %9 = vector.broadcast %8 : vector<1x256xf32> to vector<8x256xf32>
    %10 = arith.subf %6, %9 : vector<8x256xf32>
    %11 = math.exp %10 : vector<8x256xf32>
    %cst_7 = arith.constant dense<0.000000e+00> : vector<256xf32>
    %12 = vector.multi_reduction <add>, %11, %cst_7 [0] : vector<8x256xf32> to vector<256xf32>
    %13 = vector.shape_cast %12 : vector<256xf32> to vector<1x256xf32>
    %14 = tpu.reciprocal %13 : vector<1x256xf32> -> vector<1x256xf32>
    %15 = tpu.iota {dimensions = array<i32: 0>} : vector<8x256xi32>
    %cst_8 = arith.constant dense<0xFF800000> : vector<256xf32>
    %16 = vector.multi_reduction <maximumf>, %11, %cst_8 [0] : vector<8x256xf32> to vector<256xf32>
    %17 = vector.shape_cast %16 : vector<256xf32> to vector<1x256xf32>
    %18 = vector.broadcast %17 : vector<1x256xf32> to vector<8x256xf32>
    %19 = arith.cmpf oeq, %11, %18 : vector<8x256xf32>
    %c8_i32 = arith.constant 8 : i32
    %20 = vector.broadcast %c8_i32 : i32 to vector<8x256xi32>
    %21 = arith.select %19, %15, %20 : vector<8x256xi1>, vector<8x256xi32>
    %cst_9 = arith.constant dense<2147483647> : vector<256xi32>
    %22 = vector.multi_reduction <minsi>, %21, %cst_9 [0] : vector<8x256xi32> to vector<256xi32>
    %23 = vector.shape_cast %22 : vector<256xi32> to vector<1x256xi32>
    %24 = vector.broadcast %23 : vector<1x256xi32> to vector<8x256xi32>
    %25 = arith.cmpi eq, %15, %24 : vector<8x256xi32>
    %cst_10 = arith.constant 0.000000e+00 : f32
    %26 = vector.broadcast %cst_10 : f32 to vector<8x256xf32>
    %27 = arith.select %25, %1, %26 : vector<8x256xi1>, vector<8x256xf32>
    %cst_11 = arith.constant dense<0.000000e+00> : vector<256xf32>
    %28 = vector.multi_reduction <add>, %27, %cst_11 [0] : vector<8x256xf32> to vector<256xf32>
    %29 = vector.shape_cast %28 : vector<256xf32> to vector<1x256xf32>
    %30 = arith.mulf %29, %17 : vector<1x256xf32>
    %31 = arith.mulf %30, %14 : vector<1x256xf32>
    %cst_12 = arith.constant -1.000000e+00 : f32
    %32 = vector.broadcast %cst_12 : f32 to vector<8x256xf32>
    %33 = arith.select %25, %32, %11 : vector<8x256xi1>, vector<8x256xf32>
    %cst_13 = arith.constant dense<0xFF800000> : vector<256xf32>
    %34 = vector.multi_reduction <maximumf>, %33, %cst_13 [0] : vector<8x256xf32> to vector<256xf32>
    %35 = vector.shape_cast %34 : vector<256xf32> to vector<1x256xf32>
    %36 = vector.broadcast %35 : vector<1x256xf32> to vector<8x256xf32>
    %37 = arith.cmpf oeq, %33, %36 : vector<8x256xf32>
    %c8_i32_14 = arith.constant 8 : i32
    %38 = vector.broadcast %c8_i32_14 : i32 to vector<8x256xi32>
    %39 = arith.select %37, %15, %38 : vector<8x256xi1>, vector<8x256xi32>
    %cst_15 = arith.constant dense<2147483647> : vector<256xi32>
    %40 = vector.multi_reduction <minsi>, %39, %cst_15 [0] : vector<8x256xi32> to vector<256xi32>
    %41 = vector.shape_cast %40 : vector<256xi32> to vector<1x256xi32>
    %42 = vector.broadcast %41 : vector<1x256xi32> to vector<8x256xi32>
    %43 = arith.cmpi eq, %15, %42 : vector<8x256xi32>
    %cst_16 = arith.constant 0.000000e+00 : f32
    %44 = vector.broadcast %cst_16 : f32 to vector<8x256xf32>
    %45 = arith.select %43, %1, %44 : vector<8x256xi1>, vector<8x256xf32>
    %cst_17 = arith.constant dense<0.000000e+00> : vector<256xf32>
    %46 = vector.multi_reduction <add>, %45, %cst_17 [0] : vector<8x256xf32> to vector<256xf32>
    %47 = vector.shape_cast %46 : vector<256xf32> to vector<1x256xf32>
    %48 = arith.mulf %47, %35 : vector<1x256xf32>
    %49 = arith.mulf %48, %14 : vector<1x256xf32>
    %50 = tpu.concatenate %31, %49 in 0 : vector<1x256xf32>, vector<1x256xf32> -> vector<2x256xf32>
    %c0_18 = arith.constant 0 : index
    %c0_19 = arith.constant 0 : index
    %c0_20 = arith.constant 0 : index
    %51 = vector.load %arg5[%c0_18, %c0_19, %c0_20] : memref<1x2x256xf32, #tpu.memory_space<vmem>>, vector<1x2x256xf32>
    %52 = vector.shape_cast %51 : vector<1x2x256xf32> to vector<2x256xf32>
    %53 = vector.shape_cast %50 : vector<2x256xf32> to vector<1x2x256xf32>
    tpu.vector_store %arg5[%c0_18, %c0_19, %c0_20], %53 {strides = array<i32>} : memref<1x2x256xf32, #tpu.memory_space<vmem>>, vector<1x2x256xf32>,
    return
  }
  func.func @transform_0(%arg0: i32, %arg1: i32) -> (i32, i32, i32) {
    %c0_i32 = arith.constant 0 : i32
    %c0_i32_0 = arith.constant 0 : i32
    return %arg0, %c0_i32, %arg1 : i32, i32, i32
  }
  func.func @transform_1(%arg0: i32, %arg1: i32) -> (i32, i32) {
    %c0_i32 = arith.constant 0 : i32
    %c0_i32_0 = arith.constant 0 : i32
    %c0_i32_1 = arith.constant 0 : i32
    return %c0_i32, %c0_i32_0 : i32, i32
  }
  func.func @transform_2(%arg0: i32, %arg1: i32) -> (i32, i32) {
    %c0_i32 = arith.constant 0 : i32
    %c0_i32_0 = arith.constant 0 : i32
    %c0_i32_1 = arith.constant 0 : i32
    return %c0_i32, %c0_i32_0 : i32, i32
  }
  func.func @transform_3(%arg0: i32, %arg1: i32) -> (i32, i32, i32) {
    %c0_i32 = arith.constant 0 : i32
    %c0_i32_0 = arith.constant 0 : i32
    return %arg0, %c0_i32, %arg1 : i32, i32, i32
  }
}

</mosaic_0001>

<llo_original>
// kernel: tpu_custom_call.1
$region0: #{tpu_custom_call.1}
  #allocation0 [shape = 'u32[]', space=smem, size = 0x4, offset = 0x4, fixed_abs, tag = 'smem constant byte address 0x4 - core index']
  #allocation1 [shape = 'u32[144,128]{1,0:T(1,128)}', space=vmem, size = 0x12000, scoped, tag = 'internal scratch']
  %s0 = inlined_call_operand.hbm [shape: f32[2,8,256], index: 0, kind: input, shape index: {}]
  %s1 = inlined_call_operand.vmem [shape: f32[8,8], index: 1, kind: input, shape index: {}]
  %s2 = inlined_call_operand.vmem [shape: f32[8,1], index: 2, kind: input, shape index: {}]
  %s3 = inlined_call_operand.hbm [shape: f32[2,2,256], index: 3, kind: output, shape index: {}]
  %s4 = sld [smem:[#allocation0]]
  $region49: #{tpu_custom_call.1} parent=0
    _
  %s6 = ssub.s32 1, %s4
  %s7 = scalar_select 0, %s6, %s4
  $region1: #{tpu_custom_call.1} parent=0
    #allocation2 [shape = 'u8[16384]{0}', space=vmem, size = 0x4000, scoped, tag = 'input window, operand 0']
    #allocation3 [shape = 's32[2]{0}', space=sflag, size = 0x8, scoped, tag = 'scoped memory for tpu_custom_call.1']
    #allocation4 [shape = 's32[2]{0}', space=sflag, size = 0x8, scoped, tag = 'scoped memory for tpu_custom_call.1']
    #allocation5 [shape = 'u8[4096]{0}', space=vmem, size = 0x1000, scoped, tag = 'output window, operand 0']
    %8 = vsyncpa [#allocation3], 0
    %s9 = scalar_lea.sflag [#allocation3], 1
    %10 = vsyncpa %s9, 0
    %11 = vsyncpa [#allocation4], 0
    %s12 = scalar_lea.sflag [#allocation4], 1
    %13 = vsyncpa %s12, 0
    loop: start=0, step=1, limit=4
    $region2: #{tpu_custom_call.1} parent=1 // loop_pre_header
      _
    $region3: #{tpu_custom_call.1} parent=1 // loop_header
      %s15 = sphi 0, %s19
      %p16 = scmp.ge.s32.totalorder %s15, 4
      %s22 = sphi 0, %s34
      %s23 = sphi 0, %s30
      %s24 = sphi 0, %s22
      %s25 = sphi 0, %s23
      %s26 = sphi 0, %s24
      %s27 = sphi 0, %s25
      %s39 = sphi 0, %s41
      %s42 = sphi 0, %s39
      %s43 = sphi 0, %s42
      %s59 = sphi 0, %s43
      %s63 = sphi 0, %s63
      %s65 = sphi 0, %s63
      %s66 = sphi 0, %s65
      %s80 = sphi 0, %s66
      %s84 = sphi 0, %s84
      %s86 = sphi 0, %s84
      %s87 = sphi 0, %s86
      %s101 = sphi 0, %s87
      %s109 = sphi 0, %s111
      %s112 = sphi 0, %s109
      %s113 = sphi 0, %s112
      %s129 = sphi 0, %s113
    $region4: #{tpu_custom_call.1} parent=1 // loop_header_branch
      %18 = sbr.rel (%p16) target = $region8
    $region5: #{tpu_custom_call.1} parent=1 // loop_body
      %s20 = ssub.s32 %s15, 1
      %s21 = ssub.s32 %s15, 2
      %s28 = sadd.s32 1, %s23
      %p29 = scmp.ge.s32.totalorder %s28, 1
      %s30 = scalar_select %p29, 0, %s28
      %s31 = sadd.s32 1, %s22
      %s32 = scalar_select %p29, %s31, %s22
      %p33 = scmp.ge.s32.totalorder %s32, 2
      %s34 = scalar_select %p33, 0, %s32
      %s35 = ssub.s32 %s22, %s34
      %s36 = ssub.s32 %s23, %s30
      %s37 = sor.u32 %s35, %s36
      %p38 = scmp.eq.s32.totalorder %s37, 0
      %s40 = sadd.s32 %s39, 1
      %s41 = scalar_select %p38, %s39, %s40
      %p44 = pneg %p38
      %p45 = scmp.eq.s32.totalorder %s15, 1
      %p46 = por %p44, %p45
      %p47 = scmp.ne.s32.totalorder %s39, %s42
      %p48 = scmp.eq.s32.totalorder %s15, 0
      %p49 = por %p47, %p48
      %p50 = scmp.ne.s32.totalorder %s39, %s42
      %p51 = scmp.eq.s32.totalorder %s20, 1
      %p52 = por %p50, %p51
      %p53 = scmp.ne.s32.totalorder %s42, %s43
      %p54 = scmp.eq.s32.totalorder %s20, 0
      %p55 = por %p53, %p54
      %p56 = scmp.ne.s32.totalorder %s42, %s43
      %p57 = scmp.eq.s32.totalorder %s21, 1
      %p58 = por %p56, %p57
      %p60 = scmp.ne.s32.totalorder %s43, %s59
      %p61 = scmp.eq.s32.totalorder %s21, 0
      %p62 = por %p60, %p61
      %s64 = sadd.s32 %s63, 1
      %p67 = scmp.eq.s32.totalorder %s15, 1
      %p68 = scmp.ne.s32.totalorder %s63, %s65
      %p69 = scmp.eq.s32.totalorder %s15, 0
      %p70 = por %p68, %p69
      %p71 = scmp.ne.s32.totalorder %s63, %s65
      %p72 = scmp.eq.s32.totalorder %s20, 1
      %p73 = por %p71, %p72
      %p74 = scmp.ne.s32.totalorder %s65, %s66
      %p75 = scmp.eq.s32.totalorder %s20, 0
      %p76 = por %p74, %p75
      %p77 = scmp.ne.s32.totalorder %s65, %s66
      %p78 = scmp.eq.s32.totalorder %s21, 1
      %p79 = por %p77, %p78
      %p81 = scmp.ne.s32.totalorder %s66, %s80
      %p82 = scmp.eq.s32.totalorder %s21, 0
      %p83 = por %p81, %p82
      %s85 = sadd.s32 %s84, 1
      %p88 = scmp.eq.s32.totalorder %s15, 1
      %p89 = scmp.ne.s32.totalorder %s84, %s86
      %p90 = scmp.eq.s32.totalorder %s15, 0
      %p91 = por %p89, %p90
      %p92 = scmp.ne.s32.totalorder %s84, %s86
      %p93 = scmp.eq.s32.totalorder %s20, 1
      %p94 = por %p92, %p93
      %p95 = scmp.ne.s32.totalorder %s86, %s87
      %p96 = scmp.eq.s32.totalorder %s20, 0
      %p97 = por %p95, %p96
      %p98 = scmp.ne.s32.totalorder %s86, %s87
      %p99 = scmp.eq.s32.totalorder %s21, 1
      %p100 = por %p98, %p99
      %p102 = scmp.ne.s32.totalorder %s87, %s101
      %p103 = scmp.eq.s32.totalorder %s21, 0
      %p104 = por %p102, %p103
      %s105 = ssub.s32 %s22, %s34
      %s106 = ssub.s32 %s23, %s30
      %s107 = sor.u32 %s105, %s106
      %p108 = scmp.eq.s32.totalorder %s107, 0
      %s110 = sadd.s32 %s109, 1
      %s111 = scalar_select %p108, %s109, %s110
      %p114 = pneg %p108
      %p115 = scmp.eq.s32.totalorder %s15, 1
      %p116 = por %p114, %p115
      %p117 = scmp.ne.s32.totalorder %s109, %s112
      %p118 = scmp.eq.s32.totalorder %s15, 0
      %p119 = por %p117, %p118
      %p120 = scmp.ne.s32.totalorder %s109, %s112
      %p121 = scmp.eq.s32.totalorder %s20, 1
      %p122 = por %p120, %p121
      %p123 = scmp.ne.s32.totalorder %s112, %s113
      %p124 = scmp.eq.s32.totalorder %s20, 0
      %p125 = por %p123, %p124
      %p126 = scmp.ne.s32.totalorder %s112, %s113
      %p127 = scmp.eq.s32.totalorder %s21, 1
      %p128 = por %p126, %p127
      %p130 = scmp.ne.s32.totalorder %s113, %s129
      %p131 = scmp.eq.s32.totalorder %s21, 0
      %p132 = por %p130, %p131
      %p133 = scmp.le.s32.totalorder 1, %s15
      %p134 = scmp.lt.s32.totalorder %s15, 3
      %p135 = pnand %p133, %p134
      %p136 = pneg %p135
      // Predicated region
      $region9: #{tpu_custom_call.1} parent=5 // pred_check
        _
      $region10: #{tpu_custom_call.1} parent=5 // pred_check_branch
        %138 = sbr.rel (%p135) target = $region12
      $region11: #{tpu_custom_call.1} parent=5 // pred_region
        %s139 = ssub.s32 %s15, 1
        // Predicated region
        $region13: #{tpu_custom_call.1} parent=11 // pred_check
          %p140 = pneg %p76
        $region14: #{tpu_custom_call.1} parent=11 // pred_check_branch
          %142 = sbr.rel (%p140) target = $region16
        $region15: #{tpu_custom_call.1} parent=11 // pred_region
          _
        $region16: #{tpu_custom_call.1} parent=11 // pred_fallthru
          _
        // Predicated region
        $region17: #{tpu_custom_call.1} parent=11 // pred_check
          %p143 = pneg %p97
        $region18: #{tpu_custom_call.1} parent=11 // pred_check_branch
          %145 = sbr.rel (%p143) target = $region20
        $region19: #{tpu_custom_call.1} parent=11 // pred_region
          _
        $region20: #{tpu_custom_call.1} parent=11 // pred_fallthru
          _
      $region12: #{tpu_custom_call.1} parent=5 // pred_fallthru
        _
      %p146 = scmp.lt.s32.totalorder %s15, 2
      // Predicated region
      $region21: #{tpu_custom_call.1} parent=5 // pred_check
        %p147 = pneg %p146
      $region22: #{tpu_custom_call.1} parent=5 // pred_check_branch
        %149 = sbr.rel (%p147) target = $region24
      $region23: #{tpu_custom_call.1} parent=5 // pred_region
        // Predicated region
        $region25: #{tpu_custom_call.1} parent=23 // pred_check
          %p150 = pneg %p49
        $region26: #{tpu_custom_call.1} parent=23 // pred_check_branch
          %152 = sbr.rel (%p150) target = $region28
        $region27: #{tpu_custom_call.1} parent=23 // pred_region
          %s153 = sand.u32 %s39, 1
          %s154 = scalar_lea.sflag [#allocation3], %s153
          %s155 = sand.u32 %s39, 1
          %s156 = smul.addr %s155, 16
          %s157 = scalar_lea.vmem [#allocation2], %s156
          %s158 = smul.u32 2, %s23
          %s160 = ssub.s32 256, 256
          %161 = vsyncadd %s154, %s160
          %s162 = smul.addr %s22, 2
          %s163 = sadd.s32 %s158, %s162
          %s164 = smul.addr %s163, 128
          %s165 = scalar_lea.hbm %s0, %s164
          %s167 = sshll.u32 %s157, 4
          %s168 = int_to_ptr.vmem [resolvable:$true] %s167
          %170 = dma.hbm_to_vmem [thread:$0]  %s165, 256, %s168, %s154
        $region28: #{tpu_custom_call.1} parent=23 // pred_fallthru
          _
      $region24: #{tpu_custom_call.1} parent=5 // pred_fallthru
        _
      %p171 = scmp.le.s32.totalorder 1, %s15
      %p172 = scmp.lt.s32.totalorder %s15, 3
      %p173 = pnand %p171, %p172
      %p174 = pneg %p173
      // Predicated region
      $region29: #{tpu_custom_call.1} parent=5 // pred_check
        _
      $region30: #{tpu_custom_call.1} parent=5 // pred_check_branch
        %176 = sbr.rel (%p173) target = $region32
      $region31: #{tpu_custom_call.1} parent=5 // pred_region
        %s177 = ssub.s32 %s15, 1
        %s178 = sand.u32 %s42, 1
        %s179 = scalar_lea.sflag [#allocation3], %s178
        %s180 = sand.u32 %s42, 1
        %s181 = smul.addr %s180, 16
        %s182 = scalar_lea.vmem [#allocation2], %s181
        // Predicated region
        $region33: #{tpu_custom_call.1} parent=31 // pred_check
          %p183 = pneg %p55
        $region34: #{tpu_custom_call.1} parent=31 // pred_check_branch
          %185 = sbr.rel (%p183) target = $region36
        $region35: #{tpu_custom_call.1} parent=31 // pred_region
          %186 = dma.done %s179, 256
        $region36: #{tpu_custom_call.1} parent=31 // pred_fallthru
          _
        %s187 = sand.u32 %s42, 1
        %s188 = scalar_lea.sflag [#allocation3], %s187
        %s189 = sand.u32 %s42, 1
        %s190 = smul.addr %s189, 16
        %s191 = scalar_lea.vmem [#allocation2], %s190
        %p192 = pneg %p55
        %p193 = pneg %p52
        %p194 = pneg %p76
        %p195 = pneg %p73
        %p196 = pneg %p97
        %p197 = pneg %p94
        %p198 = pneg %p125
        %p199 = pneg %p122
        %s200 = sand.u32 %s112, 1
        %s201 = scalar_lea.sflag [#allocation4], %s200
        %s202 = sand.u32 %s112, 1
        %s203 = smul.addr %s202, 4
        %s204 = scalar_lea.vmem [#allocation5], %s203
        %s205 = smul.u32 2, %s25
        %s206 = smul.u32 2, %s25
        %v207 = vld [vmem:[%s182] sm:$0xff]
        %v208 = vld [vmem:[%s182 + $0x8] sm:$0xff]
        %v209 = vld [vmem:[%s1] sm:$0xff]
        %v210 = vld [vmem:[%s2] sm:$0xff]
        %212 = vset.pattern.permute.xlu0 0
        %213 = vperm.xlu0 %212, %v210
        %v214 = vpop.permute.xlu0 %213
        %vm216 = vcmask 64512
        %v218 = vsel %vm216, %v209, 0
        %220 = vmatprep.subr.mxu0 %v208
        %221 = vmatpush1.msra.mxu0 %v207
        %222 = vmatprep.subr.mxu0 0.0
        %223 = vmatpush1.msra.mxu0 0.0
        %224 = vmatprep.subr.mxu0 0.0
        %225 = vmatpush1.msra.mxu0 0.0
        %226 = vmatprep.subr.mxu0 0.0
        %227 = vmatpush1.msra.mxu0 0.0
        %228 = vmatprep.subr.mxu0 0.0
        %229 = vmatpush1.msra.mxu0 0.0
        %230 = vmatprep.subr.mxu0 0.0
        %231 = vmatpush1.msra.mxu0 0.0
        %232 = vmatprep.subr.mxu0 0.0
        %233 = vmatpush1.msra.mxu0 0.0
        %234 = vmatprep.subr.mxu0 0.0
        %235 = vmatpush1.msra.mxu0 0.0
        %236 = vmatprep.subr.mxu0 0.0
        %237 = vmatpush1.msra.mxu0 0.0
        %238 = vmatprep.subr.mxu0 0.0
        %239 = vmatpush1.msra.mxu0 0.0
        %240 = vmatprep.subr.mxu0 0.0
        %241 = vmatpush1.msra.mxu0 0.0
        %242 = vmatprep.subr.mxu0 0.0
        %243 = vmatpush1.msra.mxu0 0.0
        %244 = vmatprep.subr.mxu0 0.0
        %245 = vmatpush1.msra.mxu0 0.0
        %246 = vmatprep.subr.mxu0 0.0
        %247 = vmatpush1.msra.mxu0 0.0
        %248 = vmatprep.subr.mxu0 0.0
        %249 = vmatpush1.msra.mxu0 0.0
        %250 = vmatprep.subr.mxu0 0.0
        %251 = vmatpush1.msra.mxu0 0.0
        %252 = vmatprep.subr.mxu0 0.0
        %253 = vmatpush1.msra.mxu0 0.0
        %254 = vmatprep.subr.mxu0 0.0
        %255 = vmatpush1.msra.mxu0 0.0
        %256 = vmatprep.subr.mxu0 0.0
        %257 = vmatpush1.msra.mxu0 0.0
        %258 = vmatprep.subr.mxu0 0.0
        %259 = vmatpush1.msra.mxu0 0.0
        %260 = vmatprep.subr.mxu0 0.0
        %261 = vmatpush1.msra.mxu0 0.0
        %262 = vmatprep.subr.mxu0 0.0
        %263 = vmatpush1.msra.mxu0 0.0
        %264 = vmatprep.subr.mxu0 0.0
        %265 = vmatpush1.msra.mxu0 0.0
        %266 = vmatprep.subr.mxu0 0.0
        %267 = vmatpush1.msra.mxu0 0.0
        %268 = vmatprep.subr.mxu0 0.0
        %269 = vmatpush1.msra.mxu0 0.0
        %270 = vmatprep.subr.mxu0 0.0
        %271 = vmatpush1.msra.mxu0 0.0
        %272 = vmatprep.subr.mxu0 0.0
        %273 = vmatpush1.msra.mxu0 0.0
        %274 = vmatprep.subr.mxu0 0.0
        %275 = vmatpush1.msra.mxu0 0.0
        %276 = vmatprep.subr.mxu0 0.0
        %277 = vmatpush1.msra.mxu0 0.0
        %278 = vmatprep.subr.mxu0 0.0
        %279 = vmatpush1.msra.mxu0 0.0
        %280 = vmatprep.subr.mxu0 0.0
        %281 = vmatpush1.msra.mxu0 0.0
        %282 = vmatprep.subr.mxu0 0.0
        %283 = vmatpush1.msra.mxu0 0.0
        %284 = vmatprep.mubr.f32.mxu0 0.0
        %285 = vmatmul.mubr.f32.gmra.mrb[0].mxu0 %v218
        %v286 = vpop.f32.mrb[0].mxu0
        %v287 = vadd.f32 %v214, %v286
        %v288 = vpop.f32.mrb[0].mxu0
        %v289 = vadd.f32 %v214, %v288
        %290 = vdwg.mxu0
        %v291 = vrot.slane %v287, 4
        %v292 = vmax.f32 %v287, %v291
        %v293 = vrot.slane %v292, 2
        %v294 = vmax.f32 %v292, %v293
        %v295 = vrot.slane %v294, 1
        %v296 = vmax.f32 %v294, %v295
        %v297 = vrot.slane %v289, 4
        %v298 = vmax.f32 %v289, %v297
        %v299 = vrot.slane %v298, 2
        %v300 = vmax.f32 %v298, %v299
        %v301 = vrot.slane %v300, 1
        %v302 = vmax.f32 %v300, %v301
        %v303 = vsub.f32 %v287, %v296
        %v304 = vsub.f32 %v289, %v302
        %v305 = vmul.f32 %v303, 1.442695
        %v306 = vpow.pop %v305
        %v307 = vmul.f32 %v304, 1.442695
        %v308 = vpow.pop %v307
        %v309 = vrot.slane %v306, 4
        %v310 = vadd.f32 %v306, %v309
        %v311 = vrot.slane %v310, 2
        %v312 = vadd.f32 %v310, %v311
        %v313 = vrot.slane %v312, 1
        %v314 = vadd.f32 %v312, %v313
        %v315 = vrot.slane %v308, 4
        %v316 = vadd.f32 %v308, %v315
        %v317 = vrot.slane %v316, 2
        %v318 = vadd.f32 %v316, %v317
        %v319 = vrot.slane %v318, 1
        %v320 = vadd.f32 %v318, %v319
        %v321 = vrcp.pop %v314
        %v322 = vrcp.pop %v320
        %v323 = vlaneseq
        %v324 = vshrl.u32 %v323, 7
        %v325 = vrot.slane %v306, 4
        %v326 = vmax.f32 %v306, %v325
        %v327 = vrot.slane %v326, 2
        %v328 = vmax.f32 %v326, %v327
        %v329 = vrot.slane %v328, 1
        %v330 = vmax.f32 %v328, %v329
        %v331 = vrot.slane %v308, 4
        %v332 = vmax.f32 %v308, %v331
        %v333 = vrot.slane %v332, 2
        %v334 = vmax.f32 %v332, %v333
        %v335 = vrot.slane %v334, 1
        %v336 = vmax.f32 %v334, %v335
        %vm337 = vcmp.eq.f32.partialorder %v306, %v330
        %vm338 = vcmp.eq.f32.partialorder %v308, %v336
        %v339 = vsel %vm337, %v324, 8
        %v340 = vsel %vm338, %v324, 8
        %v341 = vrot.slane %v339, 4
        %vm342 = vcmp.lt.s32.totalorder %v339, %v341
        %v343 = vsel %vm342, %v339, %v341
        %v344 = vrot.slane %v343, 2
        %vm345 = vcmp.lt.s32.totalorder %v343, %v344
        %v346 = vsel %vm345, %v343, %v344
        %v347 = vrot.slane %v346, 1
        %vm348 = vcmp.lt.s32.totalorder %v346, %v347
        %v349 = vsel %vm348, %v346, %v347
        %v350 = vrot.slane %v340, 4
        %vm351 = vcmp.lt.s32.totalorder %v340, %v350
        %v352 = vsel %vm351, %v340, %v350
        %v353 = vrot.slane %v352, 2
        %vm354 = vcmp.lt.s32.totalorder %v352, %v353
        %v355 = vsel %vm354, %v352, %v353
        %v356 = vrot.slane %v355, 1
        %vm357 = vcmp.lt.s32.totalorder %v355, %v356
        %v358 = vsel %vm357, %v355, %v356
        %vm359 = vcmp.eq.s32.totalorder %v324, %v349
        %vm360 = vcmp.eq.s32.totalorder %v324, %v358
        %v361 = vsel %vm359, %v207, 0.0
        %v362 = vsel %vm360, %v208, 0.0
        %v363 = vrot.slane %v361, 4
        %v364 = vadd.f32 %v361, %v363
        %v365 = vrot.slane %v364, 2
        %v366 = vadd.f32 %v364, %v365
        %v367 = vrot.slane %v366, 1
        %v368 = vadd.f32 %v366, %v367
        %v369 = vrot.slane %v362, 4
        %v370 = vadd.f32 %v362, %v369
        %v371 = vrot.slane %v370, 2
        %v372 = vadd.f32 %v370, %v371
        %v373 = vrot.slane %v372, 1
        %v374 = vadd.f32 %v372, %v373
        %v375 = vmul.f32 %v368, %v330
        %v376 = vmul.f32 %v374, %v336
        %v377 = vmul.f32 %v375, %v321
        %v378 = vmul.f32 %v376, %v322
        %v379 = vsel %vm359, -1.0, %v306
        %v380 = vsel %vm360, -1.0, %v308
        %v381 = vrot.slane %v379, 4
        %v382 = vmax.f32 %v379, %v381
        %v383 = vrot.slane %v382, 2
        %v384 = vmax.f32 %v382, %v383
        %v385 = vrot.slane %v384, 1
        %v386 = vmax.f32 %v384, %v385
        %v387 = vrot.slane %v380, 4
        %v388 = vmax.f32 %v380, %v387
        %v389 = vrot.slane %v388, 2
        %v390 = vmax.f32 %v388, %v389
        %v391 = vrot.slane %v390, 1
        %v392 = vmax.f32 %v390, %v391
        %vm393 = vcmp.eq.f32.partialorder %v379, %v386
        %vm394 = vcmp.eq.f32.partialorder %v380, %v392
        %v395 = vsel %vm393, %v324, 8
        %v396 = vsel %vm394, %v324, 8
        %v397 = vrot.slane %v395, 4
        %vm398 = vcmp.lt.s32.totalorder %v395, %v397
        %v399 = vsel %vm398, %v395, %v397
        %v400 = vrot.slane %v399, 2
        %vm401 = vcmp.lt.s32.totalorder %v399, %v400
        %v402 = vsel %vm401, %v399, %v400
        %v403 = vrot.slane %v402, 1
        %vm404 = vcmp.lt.s32.totalorder %v402, %v403
        %v405 = vsel %vm404, %v402, %v403
        %v406 = vrot.slane %v396, 4
        %vm407 = vcmp.lt.s32.totalorder %v396, %v406
        %v408 = vsel %vm407, %v396, %v406
        %v409 = vrot.slane %v408, 2
        %vm410 = vcmp.lt.s32.totalorder %v408, %v409
        %v411 = vsel %vm410, %v408, %v409
        %v412 = vrot.slane %v411, 1
        %vm413 = vcmp.lt.s32.totalorder %v411, %v412
        %v414 = vsel %vm413, %v411, %v412
        %vm415 = vcmp.eq.s32.totalorder %v324, %v405
        %vm416 = vcmp.eq.s32.totalorder %v324, %v414
        %v417 = vsel %vm415, %v207, 0.0
        %v418 = vsel %vm416, %v208, 0.0
        %v419 = vrot.slane %v417, 4
        %v420 = vadd.f32 %v417, %v419
        %v421 = vrot.slane %v420, 2
        %v422 = vadd.f32 %v420, %v421
        %v423 = vrot.slane %v422, 1
        %v424 = vadd.f32 %v422, %v423
        %v425 = vrot.slane %v418, 4
        %v426 = vadd.f32 %v418, %v425
        %v427 = vrot.slane %v426, 2
        %v428 = vadd.f32 %v426, %v427
        %v429 = vrot.slane %v428, 1
        %v430 = vadd.f32 %v428, %v429
        %v431 = vmul.f32 %v424, %v386
        %v432 = vmul.f32 %v430, %v392
        %v433 = vmul.f32 %v431, %v321
        %v434 = vmul.f32 %v432, %v322
        %vm435 = vcmask 1040384
        %v436 = vsel %vm435, %v377, %v433
        %v437 = vsel %vm435, %v378, %v434
        %v440 = vcombine.low %v436, %v437
        %v442 = vunpack.c.l.s4 1983009808
        %v443 = vunpack.c.0.s8 %v442
        %v444 = vlaneseq
        %v445 = vshrl.u32 %v444, 7
        %v446 = vsub.s32 %v443, %v445
        %v447 = vrot.slane %v440, %v446
        %449 = vst [vmem:[%s204] sm:$0xf] %v447
        %s450 = sand.u32 %s112, 1
        %s451 = scalar_lea.sflag [#allocation4], %s450
        %s452 = sand.u32 %s112, 1
        %s453 = smul.addr %s452, 4
        %s454 = scalar_lea.vmem [#allocation5], %s453
        // Predicated region
        $region37: #{tpu_custom_call.1} parent=31 // pred_check
          %p455 = pneg %p122
        $region38: #{tpu_custom_call.1} parent=31 // pred_check_branch
          %457 = sbr.rel (%p455) target = $region40
        $region39: #{tpu_custom_call.1} parent=31 // pred_region
          %s458 = smul.u32 2, %s25
          %s460 = ssub.s32 64, 64
          %461 = vsyncadd %s451, %s460
          %s462 = smul.addr %s24, 2
          %s463 = sadd.s32 %s458, %s462
          %s464 = smul.addr %s463, 32
          %s465 = scalar_lea.hbm %s3, %s464
          %s467 = sshll.u32 %s454, 4
          %s468 = int_to_ptr.vmem [resolvable:$true] %s467
          %470 = dma.vmem_to_hbm [thread:$0]  %s468, 64, %s465, %s451
        $region40: #{tpu_custom_call.1} parent=31 // pred_fallthru
          _
      $region32: #{tpu_custom_call.1} parent=5 // pred_fallthru
        _
      %p471 = scmp.le.s32.totalorder 2, %s15
      // Predicated region
      $region41: #{tpu_custom_call.1} parent=5 // pred_check
        %p472 = pneg %p471
      $region42: #{tpu_custom_call.1} parent=5 // pred_check_branch
        %474 = sbr.rel (%p472) target = $region44
      $region43: #{tpu_custom_call.1} parent=5 // pred_region
        %s475 = ssub.s32 %s15, 2
        // Predicated region
        $region45: #{tpu_custom_call.1} parent=43 // pred_check
          %p476 = pneg %p128
        $region46: #{tpu_custom_call.1} parent=43 // pred_check_branch
          %478 = sbr.rel (%p476) target = $region48
        $region47: #{tpu_custom_call.1} parent=43 // pred_region
          %s479 = sand.u32 %s113, 1
          %s480 = scalar_lea.sflag [#allocation4], %s479
          %s481 = sand.u32 %s113, 1
          %s482 = smul.addr %s481, 4
          %s483 = scalar_lea.vmem [#allocation5], %s482
          %484 = dma.done %s480, 64
        $region48: #{tpu_custom_call.1} parent=43 // pred_fallthru
          _
      $region44: #{tpu_custom_call.1} parent=5 // pred_fallthru
        _
    $region6: #{tpu_custom_call.1} parent=1 // loop_footer
      %s19 = sadd.s32 1, %s15
    $region7: #{tpu_custom_call.1} parent=1 // loop_footer_branch
      %14 = sbr.rel target = $region3
    $region8: #{tpu_custom_call.1} parent=1 // loop_exit
      _
    %485 = vsyncpa [#allocation3], 1
    %s486 = scalar_lea.sflag [#allocation3], 1
    %487 = vsyncpa %s486, 1
    %488 = vsyncpa [#allocation4], 1
    %s489 = scalar_lea.sflag [#allocation4], 1
    %490 = vsyncpa %s489, 1

</llo_original>
